<compile_context>
chip_gen: v7x
topology: tpu7x:2x2x1
jax: 0.10.0
libtpu: 0.0.40
codegen_flags: <defaults>
</compile_context>

<pallas_src>
import functools

import jax
import jax.numpy as jnp
from jax.experimental import pallas as pl
from jax.experimental.pallas import tpu as pltpu

LANE = 128


# ----------------------------------------------------------------------------
# Helpers: padding / alignment / VMEM budget
# ----------------------------------------------------------------------------
def _round_up(x, m):
    return ((x + m - 1) // m) * m


def _sublane_align(dtype):
    # Rows per sublane pack: 8 for f32, 16 for bf16, 32 for int8/fp8.
    return max(8, 32 // jnp.dtype(dtype).itemsize)


def _tpu_vmem_capacity_bytes():
    try:
        info_fn = getattr(pltpu, "get_tpu_info", None)
        if info_fn is not None:
            cap = getattr(info_fn(), "vmem_capacity_bytes", None)
            if cap:
                return int(cap)
    except Exception:
        pass
    return 64 * 1024 * 1024  # conservative fallback (v7x per-TC VMEM)


def _vmem_budget_bytes():
    # Budget used for tile selection (leave headroom for Mosaic internals).
    return int(_tpu_vmem_capacity_bytes() * 0.6)


def _vmem_limit_bytes():
    # Scoped-VMEM limit handed to Mosaic: ~75% of physical
    # (v5e/v6e: ~96 MiB of 128; v7x: 48 MiB of 64).
    return int(_tpu_vmem_capacity_bytes() * 0.75)


def _aligned_divisors_desc(n, align, cap):
    start = max(align, (min(cap, n) // align) * align)
    opts = [c for c in range(start, align - 1, -align) if n % c == 0]
    return opts or [n]


def _pick_tiles(b_pad, d_in_pad, fused_width, d_out_pad, *,
                x_itemsize, w_itemsize, sublane):
    """Largest (tm, tk) whose double-buffered working set fits the VMEM budget."""
    budget = _vmem_budget_bytes()

    def usage(tm, tk):
        x_blk = 2 * tm * tk * x_itemsize              # double-buffered x tile
        w_blk = 2 * tk * fused_width * w_itemsize     # double-buffered weight tile
        b_blk = 2 * 8 * fused_width * 4               # bias (sublane-padded)
        o_blk = 2 * tm * d_out_pad * 4                # double-buffered out tile
        acc = tm * fused_width * 4                    # f32 fused accumulator
        return x_blk + w_blk + b_blk + o_blk + acc

    # Reduction tile: lane-aligned; bigger tk => fewer accumulator RMW passes.
    tk_opts = _aligned_divisors_desc(d_in_pad, LANE, 2048)
    # Batch tile: sublane-aligned; cap at B/2 when possible so the "parallel"
    # batch axis has >= 2 tiles to shard across v7x's two TensorCores.
    tm_cap = min(512, b_pad)
    if b_pad >= 2 * sublane:
        tm_cap = min(tm_cap, max(sublane, b_pad // 2))
    tm_opts = _aligned_divisors_desc(b_pad, sublane, tm_cap)

    for tk in tk_opts:
        for tm in tm_opts:
            if usage(tm, tk) <= budget:
                return tm, tk
    # Fall back to the smallest aligned tiles (tiny shapes always fit above).
    return tm_opts[-1], tk_opts[-1]


# ----------------------------------------------------------------------------
# One-time weight packing (do NOT call this inside the per-step forward path)
# ----------------------------------------------------------------------------
def pack_moe_params(wg, bg, we, be, *, weight_dtype=None):
    """Pack gating + expert weights into one lane-dense matmul operand.

    wg: [D_in, E], bg: [E] or [1, E], we: [E, D_in, D_out], be: [E, D_out].
    Layout of the packed weight [D_in_pad, E*D_out_pad + 128]:
      [ expert 0 | expert 1 | ... | expert E-1 | gating (first E lanes) ]
    All padding columns/rows are zero, so they contribute nothing to the dot.
    """
    d_in, num_experts = wg.shape
    d_out = we.shape[2]
    d_in_pad = _round_up(d_in, LANE)
    d_out_pad = _round_up(d_out, LANE)
    gate_block = LANE
    fused_width = num_experts * d_out_pad + gate_block

    w_dtype = weight_dtype if weight_dtype is not None else wg.dtype

    we_t = jnp.transpose(we, (1, 0, 2))                              # [D_in, E, D_out]
    we_t = jnp.pad(we_t, ((0, d_in_pad - d_in), (0, 0), (0, d_out_pad - d_out)))
    w_experts = we_t.reshape(d_in_pad, num_experts * d_out_pad)
    wg_pad = jnp.pad(wg, ((0, d_in_pad - d_in), (0, gate_block - num_experts)))
    w_pack = jnp.concatenate([w_experts, wg_pad], axis=1).astype(w_dtype)

    be_pad = jnp.pad(be.astype(jnp.float32),
                     ((0, 0), (0, d_out_pad - d_out))).reshape(1, num_experts * d_out_pad)
    bg_pad = jnp.pad(bg.reshape(1, num_experts).astype(jnp.float32),
                     ((0, 0), (0, gate_block - num_experts)))
    b_pack = jnp.concatenate([be_pad, bg_pad], axis=1)               # [1, Np] f32

    return dict(w_pack=w_pack, b_pack=b_pack, num_experts=num_experts,
                d_in=d_in, d_in_pad=d_in_pad,
                d_out=d_out, d_out_pad=d_out_pad,
                fused_width=fused_width)


# ----------------------------------------------------------------------------
# Kernel
# ----------------------------------------------------------------------------
def _moe_kernel(x_ref, w_ref, b_ref, out_ref, y_acc, *, num_experts, d_out_pad):
    """Grid = (batch tiles [parallel], D_in reduction tiles [arbitrary]).

    NOTE: the accumulator pattern requires the reduction axis (axis 1) to stay
    the innermost, sequentially-executed grid axis.
    """
    k = pl.program_id(1)

    # Single fused MXU call per step: experts and gating share one lane-dense
    # dot at the operands' native dtype, f32 accumulation.
    y = jnp.dot(x_ref[...], w_ref[...], preferred_element_type=jnp.float32)

    @pl.when(k == 0)
    def _assign():            # first step: assign (no accumulator read+write)
        y_acc[...] = y

    @pl.when(k != 0)
    def _accumulate():
        y_acc[...] += y

    @pl.when(k == pl.num_programs(1) - 1)
    def _finalize():
        yb = y_acc[...] + b_ref[...]                          # bias once, lane-dense

        # Gating softmax in f32; logits live in the last 128-lane block.
        gate_off = num_experts * d_out_pad
        logits = yb[:, gate_off:gate_off + num_experts]       # [tm, E]
        m = jnp.max(logits, axis=1, keepdims=True)
        p = jnp.exp(logits - m)
        gate = p * pl.reciprocal(jnp.sum(p, axis=1, keepdims=True), approx=True)

        # Weighted combine over lane-aligned (multiple-of-128) expert slices;
        # initialize from expert 0 instead of zeros.
        acc = gate[:, 0:1] * yb[:, 0:d_out_pad]
        for e in range(1, num_experts):                       # small static E
            acc += gate[:, e:e + 1] * yb[:, e * d_out_pad:(e + 1) * d_out_pad]
        out_ref[...] = acc.astype(out_ref.dtype)


# ----------------------------------------------------------------------------
# Wrapper
# ----------------------------------------------------------------------------
def moe_forward_packed(x, packed):
    """x: [B, D_in] (dtype should match packed['w_pack'] dtype for MXU-native
    execution). Returns [B, D_out] in f32."""
    batch, d_in = x.shape
    num_experts = packed["num_experts"]
    d_out = packed["d_out"]
    d_out_pad = packed["d_out_pad"]
    d_in_pad = packed["d_in_pad"]
    fused_width = packed["fused_width"]
    w_pack = packed["w_pack"]
    b_pack = packed["b_pack"]
    assert d_in == packed["d_in"], "x feature dim mismatch with packed params"

    sub = _sublane_align(x.dtype)
    b_pad = _round_up(batch, sub)
    x_p = jnp.pad(x, ((0, b_pad - batch), (0, d_in_pad - d_in)))

    tm, tk = _pick_tiles(b_pad, d_in_pad, fused_width, d_out_pad,
                         x_itemsize=jnp.dtype(x.dtype).itemsize,
                         w_itemsize=jnp.dtype(w_pack.dtype).itemsize,
                         sublane=sub)
    grid = (b_pad // tm, d_in_pad // tk)

    kernel = functools.partial(_moe_kernel, num_experts=num_experts,
                               d_out_pad=d_out_pad)

    out_pad = pl.pallas_call(
        kernel,
        out_shape=jax.ShapeDtypeStruct((b_pad, d_out_pad), jnp.float32),
        grid_spec=pltpu.PrefetchScalarGridSpec(
            num_scalar_prefetch=0,
            grid=grid,
            in_specs=[
                pl.BlockSpec((tm, tk), lambda i, k: (i, k)),            # x tile
                pl.BlockSpec((tk, fused_width), lambda i, k: (k, 0)),   # packed W
                pl.BlockSpec((1, fused_width), lambda i, k: (0, 0)),    # packed bias
            ],
            out_specs=pl.BlockSpec((tm, d_out_pad), lambda i, k: (i, 0)),
            scratch_shapes=[pltpu.VMEM((tm, fused_width), jnp.float32)],
        ),
        compiler_params=pltpu.CompilerParams(
            dimension_semantics=("parallel", "arbitrary"),
            vmem_limit_bytes=_vmem_limit_bytes(),
        ),
    )(x_p, w_pack, b_pack)

    return out_pad[:batch, :d_out]


# ----------------------------------------------------------------------------
# Pure-JAX reference (mirrors the PyTorch module)
# ----------------------------------------------------------------------------
def moe_reference(x, wg, bg, we, be):
    logits = x @ wg + bg.reshape(1, -1)                       # [B, E]
    gate = jax.nn.softmax(logits, axis=1)                     # [B, E]
    expert_out = jnp.einsum('bd,edo->beo', x, we) + be[None]  # [B, E, D_out]
    return jnp.einsum('be,beo->bo', gate, expert_out)


if __name__ == "__main__":
    # Small shapes consistent with the module: batch=8, input=32, output=32, 4 experts.
    B, D_IN, D_OUT, E = 8, 32, 32, 4

    key = jax.random.PRNGKey(0)
    kx, kwg, kbg, kwe, kbe = jax.random.split(key, 5)

    x = jax.random.normal(kx, (B, D_IN), dtype=jnp.float32)

    bound = 1.0 / (D_IN ** 0.5)
    wg = jax.random.uniform(kwg, (D_IN, E), minval=-bound, maxval=bound,
                            dtype=jnp.float32)
    bg = jax.random.uniform(kbg, (E,), minval=-bound, maxval=bound,
                            dtype=jnp.float32)
    we = jax.random.uniform(kwe, (E, D_IN, D_OUT), minval=-bound, maxval=bound,
                            dtype=jnp.float32)
    be = jax.random.uniform(kbe, (E, D_OUT), minval=-bound, maxval=bound,
                            dtype=jnp.float32)

    ref = moe_reference(x, wg, bg, we, be)

    # f32 path (tolerance absorbs the approx EUP reciprocal in the softmax).
    packed_f32 = pack_moe_params(wg, bg, we, be)          # packed ONCE, outside forward
    out_f32 = moe_forward_packed(x, packed_f32)
    jax.block_until_ready(out_f32)
    assert out_f32.shape == (B, D_OUT)
    assert jnp.allclose(out_f32, ref, atol=1e-2, rtol=1e-2), "f32 mismatch vs reference"

    # bf16 compute path (MXU-native operands, f32 accumulation) -> looser tolerance.
    packed_bf16 = pack_moe_params(wg, bg, we, be, weight_dtype=jnp.bfloat16)
    out_bf16 = moe_forward_packed(x.astype(jnp.bfloat16), packed_bf16)
    jax.block_until_ready(out_bf16)
    assert out_bf16.shape == (B, D_OUT)
    assert jnp.allclose(out_bf16, ref, atol=5e-2, rtol=5e-2), "bf16 mismatch vs reference"

    print("KERNEL_OK")
</pallas_src>

<mosaic_0001>
module attributes {stable_mosaic.version = 11 : i64} {
  func.func @_moe_kernel(%arg0: i32, %arg1: i32, %arg2: memref<8x128xf32, #tpu.memory_space<vmem>>, %arg3: memref<128x640xf32, #tpu.memory_space<vmem>>, %arg4: memref<1x640xf32, #tpu.memory_space<vmem>>, %arg5: memref<8x128xf32, #tpu.memory_space<vmem>>, %arg6: memref<8x640xf32, #tpu.memory_space<vmem>>) attributes {dimension_semantics = [#tpu.dimension_semantics<parallel>, #tpu.dimension_semantics<arbitrary>], iteration_bounds = array<i64: 1, 1>, scalar_prefetch = 0 : i64, scratch_operands = 1 : i64, tpu.core_type = #tpu.core_type<tc>, window_params = [{transform_indices = @transform_0, window_bounds = array<i64: 8, 128>}, {transform_indices = @transform_1, window_bounds = array<i64: 128, 640>}, {pipeline_mode = #tpu.pipeline_mode<synchronous>, transform_indices = @transform_2, window_bounds = array<i64: 1, 640>}, {transform_indices = @transform_3, window_bounds = array<i64: 8, 128>}]} {
    %c0 = arith.constant 0 : index
    %c0_0 = arith.constant 0 : index
    %0 = vector.load %arg2[%c0, %c0_0] : memref<8x128xf32, #tpu.memory_space<vmem>>, vector<8x128xf32>
    %c0_1 = arith.constant 0 : index
    %c0_2 = arith.constant 0 : index
    %1 = vector.load %arg3[%c0_1, %c0_2] : memref<128x640xf32, #tpu.memory_space<vmem>>, vector<128x640xf32>
    %cst = arith.constant dense<0.000000e+00> : vector<8x640xf32>
    %2 = tpu.matmul %0, %1, %cst {dimension_numbers = #tpu.dot_dimension_numbers<[1], [0], [0], [1], [0, 0, 1, 1], [], []>} : vector<8x128xf32>, vector<128x640xf32>, vector<8x640xf32> -> vector<8x640xf32>
    %c0_i32 = arith.constant 0 : i32
    %3 = arith.cmpi eq, %arg1, %c0_i32 : i32
    %4 = arith.extui %3 : i1 to i32
    %c0_i32_3 = arith.constant 0 : i32
    %5 = arith.cmpi ne, %4, %c0_i32_3 : i32
    scf.if %5 {
      %c0_8 = arith.constant 0 : index
      %c0_9 = arith.constant 0 : index
      %12 = vector.load %arg6[%c0_8, %c0_9] : memref<8x640xf32, #tpu.memory_space<vmem>>, vector<8x640xf32>
      tpu.vector_store %arg6[%c0_8, %c0_9], %2 {strides = array<i32>} : memref<8x640xf32, #tpu.memory_space<vmem>>, vector<8x640xf32>,
    } else {
    }
    %c0_i32_4 = arith.constant 0 : i32
    %6 = arith.cmpi ne, %arg1, %c0_i32_4 : i32
    %7 = arith.extui %6 : i1 to i32
    %c0_i32_5 = arith.constant 0 : i32
    %8 = arith.cmpi ne, %7, %c0_i32_5 : i32
    scf.if %8 {
      %c0_8 = arith.constant 0 : index
      %c0_9 = arith.constant 0 : index
      %12 = vector.load %arg6[%c0_8, %c0_9] : memref<8x640xf32, #tpu.memory_space<vmem>>, vector<8x640xf32>
      %13 = arith.addf %12, %2 : vector<8x640xf32>
      %c0_10 = arith.constant 0 : index
      %c0_11 = arith.constant 0 : index
      %14 = vector.load %arg6[%c0_10, %c0_11] : memref<8x640xf32, #tpu.memory_space<vmem>>, vector<8x640xf32>
      tpu.vector_store %arg6[%c0_10, %c0_11], %13 {strides = array<i32>} : memref<8x640xf32, #tpu.memory_space<vmem>>, vector<8x640xf32>,
    } else {
    }
    %c0_i32_6 = arith.constant 0 : i32
    %9 = arith.cmpi eq, %arg1, %c0_i32_6 : i32
    %10 = arith.extui %9 : i1 to i32
    %c0_i32_7 = arith.constant 0 : i32
    %11 = arith.cmpi ne, %10, %c0_i32_7 : i32
    scf.if %11 {
      %c0_8 = arith.constant 0 : index
      %c0_9 = arith.constant 0 : index
      %12 = vector.load %arg6[%c0_8, %c0_9] : memref<8x640xf32, #tpu.memory_space<vmem>>, vector<8x640xf32>
      %c0_10 = arith.constant 0 : index
      %c0_11 = arith.constant 0 : index
      %13 = vector.load %arg4[%c0_10, %c0_11] : memref<1x640xf32, #tpu.memory_space<vmem>>, vector<1x640xf32>
      %14 = vector.broadcast %13 : vector<1x640xf32> to vector<8x640xf32>
      %15 = arith.addf %12, %14 : vector<8x640xf32>
      %16 = vector.extract_strided_slice %15 {offsets = [0, 512], sizes = [8, 4], strides = [1, 1]} : vector<8x640xf32> to vector<8x4xf32>
      %cst_12 = arith.constant dense<0xFF800000> : vector<8xf32>
      %17 = vector.multi_reduction <maximumf>, %16, %cst_12 [1] : vector<8x4xf32> to vector<8xf32>
      %18 = vector.shape_cast %17 : vector<8xf32> to vector<8x1xf32>
      %19 = vector.broadcast %18 : vector<8x1xf32> to vector<8x4xf32>
      %20 = arith.subf %16, %19 : vector<8x4xf32>
      %21 = math.exp %20 : vector<8x4xf32>
      %cst_13 = arith.constant dense<0.000000e+00> : vector<8xf32>
      %22 = vector.multi_reduction <add>, %21, %cst_13 [1] : vector<8x4xf32> to vector<8xf32>
      %23 = vector.shape_cast %22 : vector<8xf32> to vector<8x1xf32>
      %24 = tpu.reciprocal %23 {approx = true} : vector<8x1xf32> -> vector<8x1xf32>
      %25 = vector.broadcast %24 : vector<8x1xf32> to vector<8x4xf32>
      %26 = arith.mulf %21, %25 : vector<8x4xf32>
      %27 = vector.extract_strided_slice %26 {offsets = [0, 0], sizes = [8, 1], strides = [1, 1]} : vector<8x4xf32> to vector<8x1xf32>
      %28 = vector.extract_strided_slice %15 {offsets = [0, 0], sizes = [8, 128], strides = [1, 1]} : vector<8x640xf32> to vector<8x128xf32>
      %29 = vector.broadcast %27 : vector<8x1xf32> to vector<8x128xf32>
      %30 = arith.mulf %29, %28 : vector<8x128xf32>
      %31 = vector.extract_strided_slice %26 {offsets = [0, 1], sizes = [8, 1], strides = [1, 1]} : vector<8x4xf32> to vector<8x1xf32>
      %32 = vector.extract_strided_slice %15 {offsets = [0, 128], sizes = [8, 128], strides = [1, 1]} : vector<8x640xf32> to vector<8x128xf32>
      %33 = vector.broadcast %31 : vector<8x1xf32> to vector<8x128xf32>
      %34 = arith.mulf %33, %32 : vector<8x128xf32>
      %35 = arith.addf %30, %34 : vector<8x128xf32>
      %36 = vector.extract_strided_slice %26 {offsets = [0, 2], sizes = [8, 1], strides = [1, 1]} : vector<8x4xf32> to vector<8x1xf32>
      %37 = vector.extract_strided_slice %15 {offsets = [0, 256], sizes = [8, 128], strides = [1, 1]} : vector<8x640xf32> to vector<8x128xf32>
      %38 = vector.broadcast %36 : vector<8x1xf32> to vector<8x128xf32>
      %39 = arith.mulf %38, %37 : vector<8x128xf32>
      %40 = arith.addf %35, %39 : vector<8x128xf32>
      %41 = vector.extract_strided_slice %26 {offsets = [0, 3], sizes = [8, 1], strides = [1, 1]} : vector<8x4xf32> to vector<8x1xf32>
      %42 = vector.extract_strided_slice %15 {offsets = [0, 384], sizes = [8, 128], strides = [1, 1]} : vector<8x640xf32> to vector<8x128xf32>
      %43 = vector.broadcast %41 : vector<8x1xf32> to vector<8x128xf32>
      %44 = arith.mulf %43, %42 : vector<8x128xf32>
      %45 = arith.addf %40, %44 : vector<8x128xf32>
      %c0_14 = arith.constant 0 : index
      %c0_15 = arith.constant 0 : index
      %46 = vector.load %arg5[%c0_14, %c0_15] : memref<8x128xf32, #tpu.memory_space<vmem>>, vector<8x128xf32>
      tpu.vector_store %arg5[%c0_14, %c0_15], %45 {strides = array<i32>} : memref<8x128xf32, #tpu.memory_space<vmem>>, vector<8x128xf32>,
    } else {
    }
    return
  }
  func.func @transform_0(%arg0: i32, %arg1: i32) -> (i32, i32) {
    %c0_i32 = arith.constant 0 : i32
    return %arg0, %arg1 : i32, i32
  }
  func.func @transform_1(%arg0: i32, %arg1: i32) -> (i32, i32) {
    %c0_i32 = arith.constant 0 : i32
    %c0_i32_0 = arith.constant 0 : i32
    return %arg1, %c0_i32 : i32, i32
  }
  func.func @transform_2(%arg0: i32, %arg1: i32) -> (i32, i32) {
    %c0_i32 = arith.constant 0 : i32
    %c0_i32_0 = arith.constant 0 : i32
    %c0_i32_1 = arith.constant 0 : i32
    return %c0_i32, %c0_i32_0 : i32, i32
  }
  func.func @transform_3(%arg0: i32, %arg1: i32) -> (i32, i32) {
    %c0_i32 = arith.constant 0 : i32
    %c0_i32_0 = arith.constant 0 : i32
    return %arg0, %c0_i32 : i32, i32
  }
}

</mosaic_0001>

<llo_original>
// kernel: tpu_custom_call.1
$region0: #{tpu_custom_call.1}
  #allocation0 [shape = 'u32[]', space=smem, size = 0x4, offset = 0x4, fixed_abs, tag = 'smem constant byte address 0x4 - core index']
  #allocation1 [shape = 'u32[144,128]{1,0:T(1,128)}', space=vmem, size = 0x12000, scoped, tag = 'internal scratch']
  #allocation2 [shape = 'f32[8,640]{1,0:T(8,128)}', space=vmem, size = 0x5000, scoped, tag = 'scratch operand']
  %s0 = inlined_call_operand.hbm [shape: f32[8,128], index: 0, kind: input, shape index: {}]
  %s1 = inlined_call_operand.hbm [shape: f32[128,640], index: 1, kind: input, shape index: {}]
  %s2 = inlined_call_operand.vmem [shape: f32[1,640], index: 2, kind: input, shape index: {}]
  %s3 = inlined_call_operand.hbm [shape: f32[8,128], index: 3, kind: output, shape index: {}]
  %s4 = sld [smem:[#allocation0]]
  $region42: #{tpu_custom_call.1} parent=0
    _
  %s6 = ssub.s32 1, %s4
  %s7 = scalar_select 0, %s6, %s4
  $region1: #{tpu_custom_call.1} parent=0
    #allocation3 [shape = 'u8[4096]{0}', space=vmem, size = 0x1000, scoped, tag = 'input window, operand 0, single buffered']
    #allocation4 [shape = 's32[1]{0}', space=sflag, size = 0x4, scoped, tag = 'scoped memory for tpu_custom_call.1']
    #allocation5 [shape = 's32[1]{0}', space=sflag, size = 0x4, scoped, tag = 'scoped memory for tpu_custom_call.1']
    #allocation6 [shape = 'u8[327680]{0}', space=vmem, size = 0x50000, scoped, tag = 'input window, operand 1, single buffered']
    #allocation7 [shape = 's32[1]{0}', space=sflag, size = 0x4, scoped, tag = 'scoped memory for tpu_custom_call.1']
    #allocation8 [shape = 'u8[4096]{0}', space=vmem, size = 0x1000, scoped, tag = 'output window, operand 0, single buffered']
    %8 = vsyncpa [#allocation4], 0
    %9 = vsyncpa [#allocation7], 0
    %10 = vsyncpa [#allocation5], 0
    // Predicated region
    $region2: #{tpu_custom_call.1} parent=1 // pred_check
      _
    $region3: #{tpu_custom_call.1} parent=1 // pred_check_branch
      %12 = sbr.rel (0) target = $region5
    $region4: #{tpu_custom_call.1} parent=1 // pred_region
      %s14 = ssub.s32 128, 128
      %15 = vsyncadd [#allocation4], %s14
      %s17 = sshll.u32 [#allocation3], 4
      %s18 = int_to_ptr.vmem [resolvable:$true] %s17
      %20 = dma.hbm_to_vmem [thread:$0]  %s0, 128, %s18, [#allocation4]
    $region5: #{tpu_custom_call.1} parent=1 // pred_fallthru
      _
    // Predicated region
    $region6: #{tpu_custom_call.1} parent=1 // pred_check
      _
    $region7: #{tpu_custom_call.1} parent=1 // pred_check_branch
      %22 = sbr.rel (0) target = $region9
    $region8: #{tpu_custom_call.1} parent=1 // pred_region
      %s24 = ssub.s32 10240, 10240
      %25 = vsyncadd [#allocation7], %s24
      %s26 = sshll.u32 [#allocation6], 4
      %s27 = int_to_ptr.vmem [resolvable:$true] %s26
      %32 = dma.hbm_to_vmem [thread:$0]  %s1, 10240, %s27, [#allocation7], 640, 640, 40
    $region9: #{tpu_custom_call.1} parent=1 // pred_fallthru
      _
    // Predicated region
    $region10: #{tpu_custom_call.1} parent=1 // pred_check
      _
    $region11: #{tpu_custom_call.1} parent=1 // pred_check_branch
      %34 = sbr.rel (0) target = $region13
    $region12: #{tpu_custom_call.1} parent=1 // pred_region
      _
    $region13: #{tpu_custom_call.1} parent=1 // pred_fallthru
      _
    // Predicated region
    $region14: #{tpu_custom_call.1} parent=1 // pred_check
      _
    $region15: #{tpu_custom_call.1} parent=1 // pred_check_branch
      %36 = sbr.rel (0) target = $region17
    $region16: #{tpu_custom_call.1} parent=1 // pred_region
      %37 = dma.done [#allocation4], 128
    $region17: #{tpu_custom_call.1} parent=1 // pred_fallthru
      _
    // Predicated region
    $region18: #{tpu_custom_call.1} parent=1 // pred_check
      _
    $region19: #{tpu_custom_call.1} parent=1 // pred_check_branch
      %39 = sbr.rel (0) target = $region21
    $region20: #{tpu_custom_call.1} parent=1 // pred_region
      %40 = dma.done [#allocation7], 10240
    $region21: #{tpu_custom_call.1} parent=1 // pred_fallthru
      _
    %v41 = vld [vmem:[#allocation3] sm:$0xff]
    %v42 = vld [vmem:[#allocation6] sm:$0xff]
    %v43 = vld [vmem:[#allocation6 + $0x8] sm:$0xff]
    %v44 = vld [vmem:[#allocation6 + $0x10] sm:$0xff]
    %v45 = vld [vmem:[#allocation6 + $0x18] sm:$0xff]
    %v46 = vld [vmem:[#allocation6 + $0x20] sm:$0xff]
    %v47 = vld [vmem:[#allocation6 + $0x28] sm:$0xff]
    %v48 = vld [vmem:[#allocation6 + $0x30] sm:$0xff]
    %v49 = vld [vmem:[#allocation6 + $0x38] sm:$0xff]
    %v50 = vld [vmem:[#allocation6 + $0x40] sm:$0xff]
    %v51 = vld [vmem:[#allocation6 + $0x48] sm:$0xff]
    %v52 = vld [vmem:[#allocation6 + $0x50] sm:$0xff]
    %v53 = vld [vmem:[#allocation6 + $0x58] sm:$0xff]
    %v54 = vld [vmem:[#allocation6 + $0x60] sm:$0xff]
    %v55 = vld [vmem:[#allocation6 + $0x68] sm:$0xff]
    %v56 = vld [vmem:[#allocation6 + $0x70] sm:$0xff]
    %v57 = vld [vmem:[#allocation6 + $0x78] sm:$0xff]
    %v58 = vld [vmem:[#allocation6 + $0x80] sm:$0xff]
    %v59 = vld [vmem:[#allocation6 + $0x88] sm:$0xff]
    %v60 = vld [vmem:[#allocation6 + $0x90] sm:$0xff]
    %v61 = vld [vmem:[#allocation6 + $0x98] sm:$0xff]
    %v62 = vld [vmem:[#allocation6 + $0xa0] sm:$0xff]
    %v63 = vld [vmem:[#allocation6 + $0xa8] sm:$0xff]
    %v64 = vld [vmem:[#allocation6 + $0xb0] sm:$0xff]
    %v65 = vld [vmem:[#allocation6 + $0xb8] sm:$0xff]
    %v66 = vld [vmem:[#allocation6 + $0xc0] sm:$0xff]
    %v67 = vld [vmem:[#allocation6 + $0xc8] sm:$0xff]
    %v68 = vld [vmem:[#allocation6 + $0xd0] sm:$0xff]
    %v69 = vld [vmem:[#allocation6 + $0xd8] sm:$0xff]
    %v70 = vld [vmem:[#allocation6 + $0xe0] sm:$0xff]
    %v71 = vld [vmem:[#allocation6 + $0xe8] sm:$0xff]
    %v72 = vld [vmem:[#allocation6 + $0xf0] sm:$0xff]
    %v73 = vld [vmem:[#allocation6 + $0xf8] sm:$0xff]
    %v74 = vld [vmem:[#allocation6 + $0x100] sm:$0xff]
    %v75 = vld [vmem:[#allocation6 + $0x108] sm:$0xff]
    %v76 = vld [vmem:[#allocation6 + $0x110] sm:$0xff]
    %v77 = vld [vmem:[#allocation6 + $0x118] sm:$0xff]
    %v78 = vld [vmem:[#allocation6 + $0x120] sm:$0xff]
    %v79 = vld [vmem:[#allocation6 + $0x128] sm:$0xff]
    %v80 = vld [vmem:[#allocation6 + $0x130] sm:$0xff]
    %v81 = vld [vmem:[#allocation6 + $0x138] sm:$0xff]
    %v82 = vld [vmem:[#allocation6 + $0x140] sm:$0xff]
    %v83 = vld [vmem:[#allocation6 + $0x148] sm:$0xff]
    %v84 = vld [vmem:[#allocation6 + $0x150] sm:$0xff]
    %v85 = vld [vmem:[#allocation6 + $0x158] sm:$0xff]
    %v86 = vld [vmem:[#allocation6 + $0x160] sm:$0xff]
    %v87 = vld [vmem:[#allocation6 + $0x168] sm:$0xff]
    %v88 = vld [vmem:[#allocation6 + $0x170] sm:$0xff]
    %v89 = vld [vmem:[#allocation6 + $0x178] sm:$0xff]
    %v90 = vld [vmem:[#allocation6 + $0x180] sm:$0xff]
    %v91 = vld [vmem:[#allocation6 + $0x188] sm:$0xff]
    %v92 = vld [vmem:[#allocation6 + $0x190] sm:$0xff]
    %v93 = vld [vmem:[#allocation6 + $0x198] sm:$0xff]
    %v94 = vld [vmem:[#allocation6 + $0x1a0] sm:$0xff]
    %v95 = vld [vmem:[#allocation6 + $0x1a8] sm:$0xff]
    %v96 = vld [vmem:[#allocation6 + $0x1b0] sm:$0xff]
    %v97 = vld [vmem:[#allocation6 + $0x1b8] sm:$0xff]
    %v98 = vld [vmem:[#allocation6 + $0x1c0] sm:$0xff]
    %v99 = vld [vmem:[#allocation6 + $0x1c8] sm:$0xff]
    %v100 = vld [vmem:[#allocation6 + $0x1d0] sm:$0xff]
    %v101 = vld [vmem:[#allocation6 + $0x1d8] sm:$0xff]
    %v102 = vld [vmem:[#allocation6 + $0x1e0] sm:$0xff]
    %v103 = vld [vmem:[#allocation6 + $0x1e8] sm:$0xff]
    %v104 = vld [vmem:[#allocation6 + $0x1f0] sm:$0xff]
    %v105 = vld [vmem:[#allocation6 + $0x1f8] sm:$0xff]
    %v106 = vld [vmem:[#allocation6 + $0x200] sm:$0xff]
    %v107 = vld [vmem:[#allocation6 + $0x208] sm:$0xff]
    %v108 = vld [vmem:[#allocation6 + $0x210] sm:$0xff]
    %v109 = vld [vmem:[#allocation6 + $0x218] sm:$0xff]
    %v110 = vld [vmem:[#allocation6 + $0x220] sm:$0xff]
    %v111 = vld [vmem:[#allocation6 + $0x228] sm:$0xff]
    %v112 = vld [vmem:[#allocation6 + $0x230] sm:$0xff]
    %v113 = vld [vmem:[#allocation6 + $0x238] sm:$0xff]
    %v114 = vld [vmem:[#allocation6 + $0x240] sm:$0xff]
    %v115 = vld [vmem:[#allocation6 + $0x248] sm:$0xff]
    %v116 = vld [vmem:[#allocation6 + $0x250] sm:$0xff]
    %v117 = vld [vmem:[#allocation6 + $0x258] sm:$0xff]
    %v118 = vld [vmem:[#allocation6 + $0x260] sm:$0xff]
    %v119 = vld [vmem:[#allocation6 + $0x268] sm:$0xff]
    %v120 = vld [vmem:[#allocation6 + $0x270] sm:$0xff]
    %v121 = vld [vmem:[#allocation6 + $0x278] sm:$0xff]
    %122 = vmatprep.subr.mxu0 %v43
    %123 = vmatpush1.msra.mxu0 %v42
    %124 = vmatprep.subr.mxu0 %v48
    %125 = vmatpush1.msra.mxu0 %v47
    %126 = vmatprep.subr.mxu0 %v53
    %127 = vmatpush1.msra.mxu0 %v52
    %128 = vmatprep.subr.mxu0 %v58
    %129 = vmatpush1.msra.mxu0 %v57
    %130 = vmatprep.subr.mxu0 %v63
    %131 = vmatpush1.msra.mxu0 %v62
    %132 = vmatprep.subr.mxu0 %v68
    %133 = vmatpush1.msra.mxu0 %v67
    %134 = vmatprep.subr.mxu0 %v73
    %135 = vmatpush1.msra.mxu0 %v72
    %136 = vmatprep.subr.mxu0 %v78
    %137 = vmatpush1.msra.mxu0 %v77
    %138 = vmatprep.subr.mxu0 %v83
    %139 = vmatpush1.msra.mxu0 %v82
    %140 = vmatprep.subr.mxu0 %v88
    %141 = vmatpush1.msra.mxu0 %v87
    %142 = vmatprep.subr.mxu0 %v93
    %143 = vmatpush1.msra.mxu0 %v92
    %144 = vmatprep.subr.mxu0 %v98
    %145 = vmatpush1.msra.mxu0 %v97
    %146 = vmatprep.subr.mxu0 %v103
    %147 = vmatpush1.msra.mxu0 %v102
    %148 = vmatprep.subr.mxu0 %v108
    %149 = vmatpush1.msra.mxu0 %v107
    %150 = vmatprep.subr.mxu0 %v113
    %151 = vmatpush1.msra.mxu0 %v112
    %152 = vmatprep.subr.mxu0 %v118
    %153 = vmatpush1.msra.mxu0 %v117
    %154 = vmatprep.subr.mxu0 0.0
    %155 = vmatpush1.msra.mxu0 0.0
    %156 = vmatprep.subr.mxu0 0.0
    %157 = vmatpush1.msra.mxu0 0.0
    %158 = vmatprep.subr.mxu0 0.0
    %159 = vmatpush1.msra.mxu0 0.0
    %160 = vmatprep.subr.mxu0 0.0
    %161 = vmatpush1.msra.mxu0 0.0
    %162 = vmatprep.subr.mxu0 0.0
    %163 = vmatpush1.msra.mxu0 0.0
    %164 = vmatprep.subr.mxu0 0.0
    %165 = vmatpush1.msra.mxu0 0.0
    %166 = vmatprep.subr.mxu0 0.0
    %167 = vmatpush1.msra.mxu0 0.0
    %168 = vmatprep.subr.mxu0 0.0
    %169 = vmatpush1.msra.mxu0 0.0
    %170 = vmatprep.subr.mxu0 0.0
    %171 = vmatpush1.msra.mxu0 0.0
    %172 = vmatprep.subr.mxu0 0.0
    %173 = vmatpush1.msra.mxu0 0.0
    %174 = vmatprep.subr.mxu0 0.0
    %175 = vmatpush1.msra.mxu0 0.0
    %176 = vmatprep.subr.mxu0 0.0
    %177 = vmatpush1.msra.mxu0 0.0
    %178 = vmatprep.subr.mxu0 0.0
    %179 = vmatpush1.msra.mxu0 0.0
    %180 = vmatprep.subr.mxu0 0.0
    %181 = vmatpush1.msra.mxu0 0.0
    %182 = vmatprep.subr.mxu0 0.0
    %183 = vmatpush1.msra.mxu0 0.0
    %184 = vmatprep.subr.mxu0 0.0
    %185 = vmatpush1.msra.mxu0 0.0
    %186 = vmatprep.mubr.f32.mxu0 0.0
    %187 = vmatmul.mubr.f32.gmra.mrb[0].mxu0 %v41
    %v188 = vpop.f32.mrb[0].mxu0
    %v189 = vadd.f32 0.0, %v188
    %v190 = vpop.f32.mrb[0].mxu0
    %v191 = vadd.f32 0.0, %v190
    %192 = vdwg.mxu0
    %193 = vmatprep.subr.mxu0 %v45
    %194 = vmatpush1.msra.mxu0 %v44
    %195 = vmatprep.subr.mxu0 %v50
    %196 = vmatpush1.msra.mxu0 %v49
    %197 = vmatprep.subr.mxu0 %v55
    %198 = vmatpush1.msra.mxu0 %v54
    %199 = vmatprep.subr.mxu0 %v60
    %200 = vmatpush1.msra.mxu0 %v59
    %201 = vmatprep.subr.mxu0 %v65
    %202 = vmatpush1.msra.mxu0 %v64
    %203 = vmatprep.subr.mxu0 %v70
    %204 = vmatpush1.msra.mxu0 %v69
    %205 = vmatprep.subr.mxu0 %v75
    %206 = vmatpush1.msra.mxu0 %v74
    %207 = vmatprep.subr.mxu0 %v80
    %208 = vmatpush1.msra.mxu0 %v79
    %209 = vmatprep.subr.mxu0 %v85
    %210 = vmatpush1.msra.mxu0 %v84
    %211 = vmatprep.subr.mxu0 %v90
    %212 = vmatpush1.msra.mxu0 %v89
    %213 = vmatprep.subr.mxu0 %v95
    %214 = vmatpush1.msra.mxu0 %v94
    %215 = vmatprep.subr.mxu0 %v100
    %216 = vmatpush1.msra.mxu0 %v99
    %217 = vmatprep.subr.mxu0 %v105
    %218 = vmatpush1.msra.mxu0 %v104
    %219 = vmatprep.subr.mxu0 %v110
    %220 = vmatpush1.msra.mxu0 %v109
    %221 = vmatprep.subr.mxu0 %v115
    %222 = vmatpush1.msra.mxu0 %v114
    %223 = vmatprep.subr.mxu0 %v120
    %224 = vmatpush1.msra.mxu0 %v119
    %225 = vmatprep.subr.mxu0 0.0
    %226 = vmatpush1.msra.mxu0 0.0
    %227 = vmatprep.subr.mxu0 0.0
    %228 = vmatpush1.msra.mxu0 0.0
    %229 = vmatprep.subr.mxu0 0.0
    %230 = vmatpush1.msra.mxu0 0.0
    %231 = vmatprep.subr.mxu0 0.0
    %232 = vmatpush1.msra.mxu0 0.0
    %233 = vmatprep.subr.mxu0 0.0
    %234 = vmatpush1.msra.mxu0 0.0
    %235 = vmatprep.subr.mxu0 0.0
    %236 = vmatpush1.msra.mxu0 0.0
    %237 = vmatprep.subr.mxu0 0.0
    %238 = vmatpush1.msra.mxu0 0.0
    %239 = vmatprep.subr.mxu0 0.0
    %240 = vmatpush1.msra.mxu0 0.0
    %241 = vmatprep.subr.mxu0 0.0
    %242 = vmatpush1.msra.mxu0 0.0
    %243 = vmatprep.subr.mxu0 0.0
    %244 = vmatpush1.msra.mxu0 0.0
    %245 = vmatprep.subr.mxu0 0.0
    %246 = vmatpush1.msra.mxu0 0.0
    %247 = vmatprep.subr.mxu0 0.0
    %248 = vmatpush1.msra.mxu0 0.0
    %249 = vmatprep.subr.mxu0 0.0
    %250 = vmatpush1.msra.mxu0 0.0
    %251 = vmatprep.subr.mxu0 0.0
    %252 = vmatpush1.msra.mxu0 0.0
    %253 = vmatprep.subr.mxu0 0.0
    %254 = vmatpush1.msra.mxu0 0.0
    %255 = vmatprep.subr.mxu0 0.0
    %256 = vmatpush1.msra.mxu0 0.0
    %257 = vmatprep.mubr.f32.mxu0 0.0
    %258 = vmatmul.mubr.f32.gmra.mrb[0].mxu0 %v41
    %v259 = vpop.f32.mrb[0].mxu0
    %v260 = vadd.f32 0.0, %v259
    %v261 = vpop.f32.mrb[0].mxu0
    %v262 = vadd.f32 0.0, %v261
    %263 = vdwg.mxu0
    %264 = vmatprep.subr.mxu0 0.0
    %265 = vmatpush1.msra.mxu0 %v46
    %266 = vmatprep.subr.mxu0 0.0
    %267 = vmatpush1.msra.mxu0 %v51
    %268 = vmatprep.subr.mxu0 0.0
    %269 = vmatpush1.msra.mxu0 %v56
    %270 = vmatprep.subr.mxu0 0.0
    %271 = vmatpush1.msra.mxu0 %v61
    %272 = vmatprep.subr.mxu0 0.0
    %273 = vmatpush1.msra.mxu0 %v66
    %274 = vmatprep.subr.mxu0 0.0
    %275 = vmatpush1.msra.mxu0 %v71
    %276 = vmatprep.subr.mxu0 0.0
    %277 = vmatpush1.msra.mxu0 %v76
    %278 = vmatprep.subr.mxu0 0.0
    %279 = vmatpush1.msra.mxu0 %v81
    %280 = vmatprep.subr.mxu0 0.0
    %281 = vmatpush1.msra.mxu0 %v86
    %282 = vmatprep.subr.mxu0 0.0
    %283 = vmatpush1.msra.mxu0 %v91
    %284 = vmatprep.subr.mxu0 0.0
    %285 = vmatpush1.msra.mxu0 %v96
    %286 = vmatprep.subr.mxu0 0.0
    %287 = vmatpush1.msra.mxu0 %v101
    %288 = vmatprep.subr.mxu0 0.0
    %289 = vmatpush1.msra.mxu0 %v106
    %290 = vmatprep.subr.mxu0 0.0
    %291 = vmatpush1.msra.mxu0 %v111
    %292 = vmatprep.subr.mxu0 0.0
    %293 = vmatpush1.msra.mxu0 %v116
    %294 = vmatprep.subr.mxu0 0.0
    %295 = vmatpush1.msra.mxu0 %v121
    %296 = vmatprep.subr.mxu0 0.0
    %297 = vmatpush1.msra.mxu0 0.0
    %298 = vmatprep.subr.mxu0 0.0
    %299 = vmatpush1.msra.mxu0 0.0
    %300 = vmatprep.subr.mxu0 0.0
    %301 = vmatpush1.msra.mxu0 0.0
    %302 = vmatprep.subr.mxu0 0.0
    %303 = vmatpush1.msra.mxu0 0.0
    %304 = vmatprep.subr.mxu0 0.0
    %305 = vmatpush1.msra.mxu0 0.0
    %306 = vmatprep.subr.mxu0 0.0
    %307 = vmatpush1.msra.mxu0 0.0
    %308 = vmatprep.subr.mxu0 0.0
    %309 = vmatpush1.msra.mxu0 0.0
    %310 = vmatprep.subr.mxu0 0.0
    %311 = vmatpush1.msra.mxu0 0.0
    %312 = vmatprep.subr.mxu0 0.0
    %313 = vmatpush1.msra.mxu0 0.0
    %314 = vmatprep.subr.mxu0 0.0
    %315 = vmatpush1.msra.mxu0 0.0
    %316 = vmatprep.subr.mxu0 0.0
    %317 = vmatpush1.msra.mxu0 0.0
    %318 = vmatprep.subr.mxu0 0.0
    %319 = vmatpush1.msra.mxu0 0.0
    %320 = vmatprep.subr.mxu0 0.0
    %321 = vmatpush1.msra.mxu0 0.0
    %322 = vmatprep.subr.mxu0 0.0
    %323 = vmatpush1.msra.mxu0 0.0
    %324 = vmatprep.subr.mxu0 0.0
    %325 = vmatpush1.msra.mxu0 0.0
    %326 = vmatprep.subr.mxu0 0.0
    %327 = vmatpush1.msra.mxu0 0.0
    %328 = vmatprep.mubr.f32.mxu0 0.0
    %329 = vmatmul.mubr.f32.gmra.mrb[0].mxu0 %v41
    %v330 = vpop.f32.mrb[0].mxu0
    %v331 = vadd.f32 0.0, %v330
    %v332 = vpop.f32.mrb[0].mxu0
    %333 = vdwg.mxu0
    %p334 = scmp.eq.s32.totalorder 0, 0
    // Predicated region
    $region22: #{tpu_custom_call.1} parent=1 // pred_check
      %p335 = pneg %p334
    $region23: #{tpu_custom_call.1} parent=1 // pred_check_branch
      %337 = sbr.rel (%p335) target = $region25
    $region24: #{tpu_custom_call.1} parent=1 // pred_region
      %338 = vst [vmem:[#allocation2] sm:$0xff] %v189
      %339 = vst [vmem:[#allocation2 + $0x8] sm:$0xff] %v191
      %340 = vst [vmem:[#allocation2 + $0x10] sm:$0xff] %v260
      %341 = vst [vmem:[#allocation2 + $0x18] sm:$0xff] %v262
      %342 = vst [vmem:[#allocation2 + $0x20] sm:$0xff] %v331
    $region25: #{tpu_custom_call.1} parent=1 // pred_fallthru
      _
    %p343 = scmp.ne.s32.totalorder 0, 0
    // Predicated region
    $region26: #{tpu_custom_call.1} parent=1 // pred_check
      %p344 = pneg %p343
    $region27: #{tpu_custom_call.1} parent=1 // pred_check_branch
      %346 = sbr.rel (%p344) target = $region29
    $region28: #{tpu_custom_call.1} parent=1 // pred_region
      %v347 = vld [vmem:[#allocation2] sm:$0xff]
      %v348 = vld [vmem:[#allocation2 + $0x8] sm:$0xff]
      %v349 = vld [vmem:[#allocation2 + $0x10] sm:$0xff]
      %v350 = vld [vmem:[#allocation2 + $0x18] sm:$0xff]
      %v351 = vld [vmem:[#allocation2 + $0x20] sm:$0xff]
      %v352 = vadd.f32 %v347, %v189
      %v353 = vadd.f32 %v348, %v191
      %v354 = vadd.f32 %v349, %v260
      %v355 = vadd.f32 %v350, %v262
      %v356 = vadd.f32 %v351, %v331
      %357 = vst [vmem:[#allocation2] sm:$0xff] %v352
      %358 = vst [vmem:[#allocation2 + $0x8] sm:$0xff] %v353
      %359 = vst [vmem:[#allocation2 + $0x10] sm:$0xff] %v354
      %360 = vst [vmem:[#allocation2 + $0x18] sm:$0xff] %v355
      %361 = vst [vmem:[#allocation2 + $0x20] sm:$0xff] %v356
    $region29: #{tpu_custom_call.1} parent=1 // pred_fallthru
      _
    // Predicated region
    $region30: #{tpu_custom_call.1} parent=1 // pred_check
      %p362 = pneg %p334
    $region31: #{tpu_custom_call.1} parent=1 // pred_check_branch
      %364 = sbr.rel (%p362) target = $region33
    $region32: #{tpu_custom_call.1} parent=1 // pred_region
      %v365 = vld [vmem:[#allocation2] sm:$0xff]
      %v366 = vld [vmem:[#allocation2 + $0x8] sm:$0xff]
      %v367 = vld [vmem:[#allocation2 + $0x10] sm:$0xff]
      %v368 = vld [vmem:[#allocation2 + $0x18] sm:$0xff]
      %v369 = vld [vmem:[#allocation2 + $0x20] sm:$0xff]
      %v370 = vld [vmem:[%s2] sm:$0x1f]
      %v372 = vlaneseq
      %v373 = vshrl.u32 %v372, 7
      %v374 = vsub.s32 0, %v373
      %v375 = vrot.slane %v370, %v374
      %v376 = vlaneseq
      %v377 = vshrl.u32 %v376, 7
      %v378 = vsub.s32 1, %v377
      %v379 = vrot.slane %v370, %v378
      %v380 = vlaneseq
      %v381 = vshrl.u32 %v380, 7
      %v382 = vsub.s32 2, %v381
      %v383 = vrot.slane %v370, %v382
      %v384 = vlaneseq
      %v385 = vshrl.u32 %v384, 7
      %v386 = vsub.s32 3, %v385
      %v387 = vrot.slane %v370, %v386
      %v388 = vlaneseq
      %v389 = vshrl.u32 %v388, 7
      %v390 = vsub.s32 4, %v389
      %v391 = vrot.slane %v370, %v390
      %v397 = vadd.f32 %v365, %v375
      %v398 = vadd.f32 %v366, %v379
      %v399 = vadd.f32 %v367, %v383
      %v400 = vadd.f32 %v368, %v387
      %v401 = vadd.f32 %v369, %v391
      %vm402 = vcmask 31744
      %v403 = vsel %vm402, %v401, -inf
      %404 = vmax.xlane.f32.xlu0 %v403
      %v405 = vpop.xlane.xlu0 %404
      %v406 = vsub.f32 %v401, %v405
      %v407 = vmul.f32 %v406, 1.442695
      %v408 = vpow.pop %v407
      %v409 = vsel %vm402, %v408, 0.0
      %410 = vadd.xlane.f32.xlu0 %v409
      %v411 = vpop.xlane.xlu0 %410
      %v412 = vrcp.pop %v411
      %v413 = vmul.f32 %v408, %v412
      %415 = vset.pattern.permute.xlu0 0
      %416 = vperm.xlu0 %415, %v413
      %v417 = vpop.permute.xlu0 %416
      %v419 = vmul.f32 %v417, %v397
      %420 = vset.pattern.permute.xlu0 1
      %421 = vperm.xlu0 %420, %v413
      %v422 = vpop.permute.xlu0 %421
      %v424 = vmul.f32 %v422, %v398
      %v425 = vadd.f32 %v419, %v424
      %426 = vset.pattern.permute.xlu0 2
      %427 = vperm.xlu0 %426, %v413
      %v428 = vpop.permute.xlu0 %427
      %v430 = vmul.f32 %v428, %v399
      %v431 = vadd.f32 %v425, %v430
      %432 = vset.pattern.permute.xlu0 3
      %433 = vperm.xlu0 %432, %v413
      %v434 = vpop.permute.xlu0 %433
      %v436 = vmul.f32 %v434, %v400
      %v437 = vadd.f32 %v431, %v436
      %438 = vst [vmem:[#allocation8] sm:$0xff] %v437
    $region33: #{tpu_custom_call.1} parent=1 // pred_fallthru
      _
    // Predicated region
    $region34: #{tpu_custom_call.1} parent=1 // pred_check
      _
    $region35: #{tpu_custom_call.1} parent=1 // pred_check_branch
      %440 = sbr.rel (0) target = $region37
    $region36: #{tpu_custom_call.1} parent=1 // pred_region
      %s442 = ssub.s32 128, 128
      %443 = vsyncadd [#allocation5], %s442
      %s445 = sshll.u32 [#allocation8], 4
      %s446 = int_to_ptr.vmem [resolvable:$true] %s445
      %448 = dma.vmem_to_hbm [thread:$0]  %s446, 128, %s3, [#allocation5]
    $region37: #{tpu_custom_call.1} parent=1 // pred_fallthru
      _
    // Predicated region
    $region38: #{tpu_custom_call.1} parent=1 // pred_check
      _
    $region39: #{tpu_custom_call.1} parent=1 // pred_check_branch
      %450 = sbr.rel (0) target = $region41
    $region40: #{tpu_custom_call.1} parent=1 // pred_region
      %451 = dma.done [#allocation5], 128
    $region41: #{tpu_custom_call.1} parent=1 // pred_fallthru
      _
    %452 = vsyncpa [#allocation4], 1
    %453 = vsyncpa [#allocation7], 1
    %454 = vsyncpa [#allocation5], 1

</llo_original>
